<compile_context>
chip_gen: v7x
topology: tpu7x:2x2x1
jax: 0.10.0
libtpu: 0.0.40
codegen_flags: <defaults>
</compile_context>

<pallas_src>
import math

import jax
import jax.numpy as jnp
from jax.experimental import pallas as pl
from jax.experimental.pallas import tpu as pltpu

LANE = 128
SUBLANE_BF16 = 16  # native bf16 sublane tile (16, 128)


def _round_up(x, m):
    return (x + m - 1) // m * m


def _pad2(x, rows, cols):
    return jnp.pad(x, ((0, rows - x.shape[0]), (0, cols - x.shape[1])))


def _vmem_limit_bytes():
    """Generation-aware VMEM budget (v7x: 64 MiB/TC, v5e/v6e: 128 MiB)."""
    try:
        cap = pltpu.get_tpu_info().vmem_capacity_bytes
    except Exception:
        cap = 64 * 1024 * 1024  # conservative fallback (v7x per-TC)
    # Leave headroom for Mosaic-internal scratch; never ask for more than 100 MiB.
    return int(max(32 * 1024 * 1024,
                   min(cap - 16 * 1024 * 1024, 100 * 1024 * 1024)))


def _drug_cell_kernel(x_ref,                 # (TB, DCp)  bf16  fused [drug|cell]
                      wp_ref, bp_ref,        # (DCp, 2Hp) bf16, (1, 2Hp) f32
                      w1_ref, b1_ref,        # (2Hp, Hp)  bf16, (1, Hp)  f32
                      w2_ref, b2_ref,        # (Hp, Op)   bf16, (1, Op)  f32
                      out_ref):              # (TB, Op)   out_dtype
    # combined = relu([drug|cell] @ blockdiag(Wd, Wc) + [bd|bc])   (TB, 2*Hp) f32
    combined = jnp.maximum(
        jnp.dot(x_ref[...], wp_ref[...], preferred_element_type=jnp.float32)
        + bp_ref[...],
        0.0,
    )
    # x = relu(combined @ W1 + b1)                                 (TB, Hp) f32
    h = jnp.maximum(
        jnp.dot(combined.astype(jnp.bfloat16), w1_ref[...],
                preferred_element_type=jnp.float32)
        + b1_ref[...],
        0.0,
    )
    # output = x @ W2 + b2
    out_ref[...] = (
        jnp.dot(h.astype(jnp.bfloat16), w2_ref[...],
                preferred_element_type=jnp.float32)
        + b2_ref[...]
    ).astype(out_ref.dtype)


def drug_cell_transformer(drug_features, cell_features, params, *,
                          block_b=1024, out_dtype=jnp.float32):
    """Full forward pass in one Pallas kernel, batch-tiled over a 1-D grid."""
    B, Dd = drug_features.shape
    Bc, Dc = cell_features.shape
    assert Bc == B
    H = params["wd"].shape[1]
    O = params["w2"].shape[1]

    DCp = _round_up(Dd + Dc, LANE)   # fused drug|cell feature lanes
    Hp = _round_up(H, LANE)
    Op = _round_up(O, LANE)

    vmem_limit = _vmem_limit_bytes()

    # --- generation-aware batch-tile sizing --------------------------------
    # Resident single-buffered weights + biases (bytes).
    weight_bytes = 2 * (DCp * 2 * Hp + 2 * Hp * Hp + Hp * Op) \
        + 4 * (2 * Hp + Hp + Op)
    out_itemsize = jnp.dtype(out_dtype).itemsize
    # Per batch row: double-buffered bf16 input block + double-buffered output
    # block + f32 intermediates (combined: 2*Hp, hidden: Hp).
    per_row = 2 * 2 * DCp + 2 * out_itemsize * Op + 4 * (3 * Hp)
    tb_cap = max(SUBLANE_BF16,
                 ((vmem_limit // 2 - weight_bytes) // per_row)
                 // SUBLANE_BF16 * SUBLANE_BF16)
    block_b = max(SUBLANE_BF16, min(block_b, tb_cap))

    # Tile the batch with minimal last-tile padding; TB is a multiple of 16 so
    # bf16 loads/stores stay sublane-dense (no masked partial tiles).
    B16 = _round_up(B, SUBLANE_BF16)
    num_tiles = math.ceil(B16 / block_b)
    if num_tiles == 1 and B16 >= 512:
        num_tiles = 2        # let ("parallel",) shard across v7x's 2 TensorCores
    TB = _round_up(math.ceil(B16 / num_tiles), SUBLANE_BF16)
    Bp = TB * num_tiles

    # --- fused input: ONE pad+cast+concat pass over the activations --------
    packed = jnp.concatenate(
        [drug_features, cell_features], axis=1).astype(jnp.bfloat16)
    x = jnp.pad(packed, ((0, Bp - B), (0, DCp - (Dd + Dc))))

    # --- block-diagonal projection weight / bias ----------------------------
    #   combined cols [0:Hp]    <- drug_projection (real values in [0:H])
    #   combined cols [Hp:2*Hp] <- cell_projection (real values in [Hp:Hp+H])
    wp = jnp.zeros((DCp, 2 * Hp), jnp.bfloat16)
    wp = wp.at[:Dd, :H].set(params["wd"].astype(jnp.bfloat16))
    wp = wp.at[Dd:Dd + Dc, Hp:Hp + H].set(params["wc"].astype(jnp.bfloat16))
    bp = jnp.zeros((1, 2 * Hp), jnp.float32)
    bp = bp.at[:, :H].set(params["bd"].astype(jnp.float32))
    bp = bp.at[:, Hp:Hp + H].set(params["bc"].astype(jnp.float32))

    # fc1 weight (2H, H) -> (2*Hp, Hp): drug rows at [0:H], cell rows at
    # [Hp:Hp+H] to match the padded `combined` layout above.
    w1 = params["w1"]
    w1p = jnp.zeros((2 * Hp, Hp), jnp.bfloat16)
    w1p = w1p.at[:H, :H].set(w1[:H].astype(jnp.bfloat16))
    w1p = w1p.at[Hp:Hp + H, :H].set(w1[H:].astype(jnp.bfloat16))
    b1 = _pad2(params["b1"], 1, Hp).astype(jnp.float32)

    w2 = _pad2(params["w2"], Hp, Op).astype(jnp.bfloat16)
    b2 = _pad2(params["b2"], 1, Op).astype(jnp.float32)

    # Broadcast weights/biases are DMA'd once (constant index_map): single buffer.
    def _wspec(shape):
        return pl.BlockSpec(shape, lambda i: (0, 0),
                            pipeline_mode=pl.Buffered(1))

    out_padded = pl.pallas_call(
        _drug_cell_kernel,
        out_shape=jax.ShapeDtypeStruct((Bp, Op), out_dtype),
        grid_spec=pltpu.PrefetchScalarGridSpec(
            num_scalar_prefetch=0,
            grid=(num_tiles,),
            in_specs=[
                pl.BlockSpec((TB, DCp), lambda i: (i, 0)),   # fused [drug|cell]
                _wspec((DCp, 2 * Hp)),                       # block-diag proj W
                _wspec((1, 2 * Hp)),                         # [bd | bc]
                _wspec((2 * Hp, Hp)),                        # fc1 W
                _wspec((1, Hp)),                             # fc1 b
                _wspec((Hp, Op)),                            # fc2 W
                _wspec((1, Op)),                             # fc2 b
            ],
            out_specs=pl.BlockSpec((TB, Op), lambda i: (i, 0)),
        ),
        compiler_params=pltpu.CompilerParams(
            dimension_semantics=("parallel",),   # shard batch tiles across TCs
            vmem_limit_bytes=vmem_limit,
        ),
    )(x, wp, bp, w1p, b1, w2, b2)

    if Bp == B and Op == O:
        return out_padded
    return out_padded[:B, :O]


def init_params(key, cell_embedding_dim, drug_embedding_dim, hidden_dim, output_dim):
    """Deterministic synthetic parameters, stored as (in, out) matrices."""
    ks = jax.random.split(key, 8)
    scale = 0.05
    return {
        "wd": scale * jax.random.normal(ks[0], (drug_embedding_dim, hidden_dim), jnp.float32),
        "bd": scale * jax.random.normal(ks[1], (1, hidden_dim), jnp.float32),
        "wc": scale * jax.random.normal(ks[2], (cell_embedding_dim, hidden_dim), jnp.float32),
        "bc": scale * jax.random.normal(ks[3], (1, hidden_dim), jnp.float32),
        "w1": scale * jax.random.normal(ks[4], (2 * hidden_dim, hidden_dim), jnp.float32),
        "b1": scale * jax.random.normal(ks[5], (1, hidden_dim), jnp.float32),
        "w2": scale * jax.random.normal(ks[6], (hidden_dim, output_dim), jnp.float32),
        "b2": scale * jax.random.normal(ks[7], (1, output_dim), jnp.float32),
    }


def _reference(drug, cell, params):
    """Pure-JAX f32 reference matching the PyTorch forward exactly."""
    d = jax.nn.relu(drug @ params["wd"] + params["bd"])
    c = jax.nn.relu(cell @ params["wc"] + params["bc"])
    combined = jnp.concatenate([d, c], axis=1)
    x = jax.nn.relu(combined @ params["w1"] + params["b1"])
    return x @ params["w2"] + params["b2"]


if __name__ == "__main__":
    key = jax.random.PRNGKey(0)
    k_drug, k_cell, k_params = jax.random.split(key, 3)

    B = 8
    cell_embedding_dim = 48
    drug_embedding_dim = 24
    hidden_dim = 32
    output_dim = 8

    drug_features = jax.random.normal(k_drug, (B, drug_embedding_dim), jnp.float32)
    cell_features = jax.random.normal(k_cell, (B, cell_embedding_dim), jnp.float32)
    params = init_params(k_params, cell_embedding_dim, drug_embedding_dim,
                         hidden_dim, output_dim)

    out = drug_cell_transformer(drug_features, cell_features, params)
    out = jax.block_until_ready(out)

    ref = _reference(drug_features, cell_features, params)
    assert out.shape == (B, output_dim)
    # bf16 MXU inputs with f32 accumulation -> loosen tolerance vs the f32 reference.
    # (Re-validate tolerance at production hidden sizes; keep fc2 LHS in f32 if
    #  tight parity with the PyTorch f32 model is required.)
    assert jnp.allclose(out, ref, atol=1e-2, rtol=1e-2), (
        f"mismatch vs reference, max abs diff = {jnp.max(jnp.abs(out - ref))}")

    print("KERNEL_OK")
</pallas_src>

<mosaic_0001>
module attributes {stable_mosaic.version = 11 : i64} {
  func.func @_drug_cell_kernel(%arg0: i32, %arg1: memref<16x128xbf16, #tpu.memory_space<vmem>>, %arg2: memref<128x256xbf16, #tpu.memory_space<vmem>>, %arg3: memref<1x256xf32, #tpu.memory_space<vmem>>, %arg4: memref<256x128xbf16, #tpu.memory_space<vmem>>, %arg5: memref<1x128xf32, #tpu.memory_space<vmem>>, %arg6: memref<128x128xbf16, #tpu.memory_space<vmem>>, %arg7: memref<1x128xf32, #tpu.memory_space<vmem>>, %arg8: memref<16x128xf32, #tpu.memory_space<vmem>>) attributes {dimension_semantics = [#tpu.dimension_semantics<parallel>], iteration_bounds = array<i64: 1>, scalar_prefetch = 0 : i64, scratch_operands = 0 : i64, tpu.core_type = #tpu.core_type<tc>, window_params = [{transform_indices = @transform_0, window_bounds = array<i64: 16, 128>}, {pipeline_mode = #tpu.pipeline_mode<synchronous>, transform_indices = @transform_1, window_bounds = array<i64: 128, 256>}, {pipeline_mode = #tpu.pipeline_mode<synchronous>, transform_indices = @transform_2, window_bounds = array<i64: 1, 256>}, {pipeline_mode = #tpu.pipeline_mode<synchronous>, transform_indices = @transform_3, window_bounds = array<i64: 256, 128>}, {pipeline_mode = #tpu.pipeline_mode<synchronous>, transform_indices = @transform_4, window_bounds = array<i64: 1, 128>}, {pipeline_mode = #tpu.pipeline_mode<synchronous>, transform_indices = @transform_5, window_bounds = array<i64: 128, 128>}, {pipeline_mode = #tpu.pipeline_mode<synchronous>, transform_indices = @transform_6, window_bounds = array<i64: 1, 128>}, {transform_indices = @transform_7, window_bounds = array<i64: 16, 128>}]} {
    %c0 = arith.constant 0 : index
    %c0_0 = arith.constant 0 : index
    %0 = vector.load %arg1[%c0, %c0_0] : memref<16x128xbf16, #tpu.memory_space<vmem>>, vector<16x128xbf16>
    %c0_1 = arith.constant 0 : index
    %c0_2 = arith.constant 0 : index
    %1 = vector.load %arg2[%c0_1, %c0_2] : memref<128x256xbf16, #tpu.memory_space<vmem>>, vector<128x256xbf16>
    %cst = arith.constant dense<0.000000e+00> : vector<16x256xf32>
    %2 = tpu.matmul %0, %1, %cst {dimension_numbers = #tpu.dot_dimension_numbers<[1], [0], [0], [1], [0, 0, 1, 1], [], []>} : vector<16x128xbf16>, vector<128x256xbf16>, vector<16x256xf32> -> vector<16x256xf32>
    %c0_3 = arith.constant 0 : index
    %c0_4 = arith.constant 0 : index
    %3 = vector.load %arg3[%c0_3, %c0_4] : memref<1x256xf32, #tpu.memory_space<vmem>>, vector<1x256xf32>
    %4 = vector.broadcast %3 : vector<1x256xf32> to vector<16x256xf32>
    %5 = arith.addf %2, %4 : vector<16x256xf32>
    %cst_5 = arith.constant 0.000000e+00 : f32
    %6 = vector.broadcast %cst_5 : f32 to vector<16x256xf32>
    %7 = arith.maximumf %5, %6 : vector<16x256xf32>
    %8 = arith.truncf %7 : vector<16x256xf32> to vector<16x256xbf16>
    %c0_6 = arith.constant 0 : index
    %c0_7 = arith.constant 0 : index
    %9 = vector.load %arg4[%c0_6, %c0_7] : memref<256x128xbf16, #tpu.memory_space<vmem>>, vector<256x128xbf16>
    %cst_8 = arith.constant dense<0.000000e+00> : vector<16x128xf32>
    %10 = tpu.matmul %8, %9, %cst_8 {dimension_numbers = #tpu.dot_dimension_numbers<[1], [0], [0], [1], [0, 0, 1, 1], [], []>} : vector<16x256xbf16>, vector<256x128xbf16>, vector<16x128xf32> -> vector<16x128xf32>
    %c0_9 = arith.constant 0 : index
    %c0_10 = arith.constant 0 : index
    %11 = vector.load %arg5[%c0_9, %c0_10] : memref<1x128xf32, #tpu.memory_space<vmem>>, vector<1x128xf32>
    %12 = vector.broadcast %11 : vector<1x128xf32> to vector<16x128xf32>
    %13 = arith.addf %10, %12 : vector<16x128xf32>
    %cst_11 = arith.constant 0.000000e+00 : f32
    %14 = vector.broadcast %cst_11 : f32 to vector<16x128xf32>
    %15 = arith.maximumf %13, %14 : vector<16x128xf32>
    %16 = arith.truncf %15 : vector<16x128xf32> to vector<16x128xbf16>
    %c0_12 = arith.constant 0 : index
    %c0_13 = arith.constant 0 : index
    %17 = vector.load %arg6[%c0_12, %c0_13] : memref<128x128xbf16, #tpu.memory_space<vmem>>, vector<128x128xbf16>
    %cst_14 = arith.constant dense<0.000000e+00> : vector<16x128xf32>
    %18 = tpu.matmul %16, %17, %cst_14 {dimension_numbers = #tpu.dot_dimension_numbers<[1], [0], [0], [1], [0, 0, 1, 1], [], []>} : vector<16x128xbf16>, vector<128x128xbf16>, vector<16x128xf32> -> vector<16x128xf32>
    %c0_15 = arith.constant 0 : index
    %c0_16 = arith.constant 0 : index
    %19 = vector.load %arg7[%c0_15, %c0_16] : memref<1x128xf32, #tpu.memory_space<vmem>>, vector<1x128xf32>
    %20 = vector.broadcast %19 : vector<1x128xf32> to vector<16x128xf32>
    %21 = arith.addf %18, %20 : vector<16x128xf32>
    %c0_17 = arith.constant 0 : index
    %c0_18 = arith.constant 0 : index
    %22 = vector.load %arg8[%c0_17, %c0_18] : memref<16x128xf32, #tpu.memory_space<vmem>>, vector<16x128xf32>
    tpu.vector_store %arg8[%c0_17, %c0_18], %21 {strides = array<i32>} : memref<16x128xf32, #tpu.memory_space<vmem>>, vector<16x128xf32>,
    return
  }
  func.func @transform_0(%arg0: i32) -> (i32, i32) {
    %c0_i32 = arith.constant 0 : i32
    %c0_i32_0 = arith.constant 0 : i32
    return %arg0, %c0_i32 : i32, i32
  }
  func.func @transform_1(%arg0: i32) -> (i32, i32) {
    %c0_i32 = arith.constant 0 : i32
    %c0_i32_0 = arith.constant 0 : i32
    %c0_i32_1 = arith.constant 0 : i32
    return %c0_i32, %c0_i32_0 : i32, i32
  }
  func.func @transform_2(%arg0: i32) -> (i32, i32) {
    %c0_i32 = arith.constant 0 : i32
    %c0_i32_0 = arith.constant 0 : i32
    %c0_i32_1 = arith.constant 0 : i32
    return %c0_i32, %c0_i32_0 : i32, i32
  }
  func.func @transform_3(%arg0: i32) -> (i32, i32) {
    %c0_i32 = arith.constant 0 : i32
    %c0_i32_0 = arith.constant 0 : i32
    %c0_i32_1 = arith.constant 0 : i32
    return %c0_i32, %c0_i32_0 : i32, i32
  }
  func.func @transform_4(%arg0: i32) -> (i32, i32) {
    %c0_i32 = arith.constant 0 : i32
    %c0_i32_0 = arith.constant 0 : i32
    %c0_i32_1 = arith.constant 0 : i32
    return %c0_i32, %c0_i32_0 : i32, i32
  }
  func.func @transform_5(%arg0: i32) -> (i32, i32) {
    %c0_i32 = arith.constant 0 : i32
    %c0_i32_0 = arith.constant 0 : i32
    %c0_i32_1 = arith.constant 0 : i32
    return %c0_i32, %c0_i32_0 : i32, i32
  }
  func.func @transform_6(%arg0: i32) -> (i32, i32) {
    %c0_i32 = arith.constant 0 : i32
    %c0_i32_0 = arith.constant 0 : i32
    %c0_i32_1 = arith.constant 0 : i32
    return %c0_i32, %c0_i32_0 : i32, i32
  }
  func.func @transform_7(%arg0: i32) -> (i32, i32) {
    %c0_i32 = arith.constant 0 : i32
    %c0_i32_0 = arith.constant 0 : i32
    return %arg0, %c0_i32 : i32, i32
  }
}

</mosaic_0001>

<llo_original>
// kernel: tpu_custom_call.1
$region0: #{tpu_custom_call.1}
  #allocation0 [shape = 'u32[]', space=smem, size = 0x4, offset = 0x4, fixed_abs, tag = 'smem constant byte address 0x4 - core index']
  #allocation1 [shape = 'u32[144,128]{1,0:T(1,128)}', space=vmem, size = 0x12000, scoped, tag = 'internal scratch']
  %s0 = inlined_call_operand.hbm [shape: bf16[16,128], index: 0, kind: input, shape index: {}]
  %s1 = inlined_call_operand.hbm [shape: bf16[128,256], index: 1, kind: input, shape index: {}]
  %s2 = inlined_call_operand.vmem [shape: f32[1,256], index: 2, kind: input, shape index: {}]
  %s3 = inlined_call_operand.hbm [shape: bf16[256,128], index: 3, kind: input, shape index: {}]
  %s4 = inlined_call_operand.vmem [shape: f32[1,128], index: 4, kind: input, shape index: {}]
  %s5 = inlined_call_operand.hbm [shape: bf16[128,128], index: 5, kind: input, shape index: {}]
  %s6 = inlined_call_operand.vmem [shape: f32[1,128], index: 6, kind: input, shape index: {}]
  %s7 = inlined_call_operand.hbm [shape: f32[16,128], index: 7, kind: output, shape index: {}]
  %s8 = sld [smem:[#allocation0]]
  $region54: #{tpu_custom_call.1} parent=0
    _
  %s10 = ssub.s32 1, %s8
  %s11 = scalar_select 0, %s10, %s8
  $region1: #{tpu_custom_call.1} parent=0
    #allocation2 [shape = 'u8[4096]{0}', space=vmem, size = 0x1000, scoped, tag = 'input window, operand 0, single buffered']
    #allocation3 [shape = 's32[1]{0}', space=sflag, size = 0x4, scoped, tag = 'scoped memory for tpu_custom_call.1']
    #allocation4 [shape = 's32[1]{0}', space=sflag, size = 0x4, scoped, tag = 'scoped memory for tpu_custom_call.1']
    #allocation5 [shape = 'u8[65536]{0}', space=vmem, size = 0x10000, scoped, tag = 'input window, operand 1, single buffered']
    #allocation6 [shape = 's32[1]{0}', space=sflag, size = 0x4, scoped, tag = 'scoped memory for tpu_custom_call.1']
    #allocation7 [shape = 'u8[65536]{0}', space=vmem, size = 0x10000, scoped, tag = 'input window, operand 3, single buffered']
    #allocation8 [shape = 'u8[32768]{0}', space=vmem, size = 0x8000, scoped, tag = 'input window, operand 5, single buffered']
    #allocation9 [shape = 's32[1]{0}', space=sflag, size = 0x4, scoped, tag = 'scoped memory for tpu_custom_call.1']
    #allocation10 [shape = 'u8[8192]{0}', space=vmem, size = 0x2000, scoped, tag = 'output window, operand 0, single buffered']
    %12 = vsyncpa [#allocation3], 0
    %13 = vsyncpa [#allocation6], 0
    %14 = vsyncpa [#allocation9], 0
    %15 = vsyncpa [#allocation4], 0
    // Predicated region
    $region2: #{tpu_custom_call.1} parent=1 // pred_check
      _
    $region3: #{tpu_custom_call.1} parent=1 // pred_check_branch
      %17 = sbr.rel (0) target = $region5
    $region4: #{tpu_custom_call.1} parent=1 // pred_region
      %s19 = ssub.s32 128, 128
      %20 = vsyncadd [#allocation3], %s19
      %s21 = sshll.u32 [#allocation2], 4
      %s22 = int_to_ptr.vmem [resolvable:$true] %s21
      %27 = dma.hbm_to_vmem [thread:$0]  %s0, 128, %s22, [#allocation3], 64, 64, 4
    $region5: #{tpu_custom_call.1} parent=1 // pred_fallthru
      _
    // Predicated region
    $region6: #{tpu_custom_call.1} parent=1 // pred_check
      _
    $region7: #{tpu_custom_call.1} parent=1 // pred_check_branch
      %29 = sbr.rel (0) target = $region9
    $region8: #{tpu_custom_call.1} parent=1 // pred_region
      %s31 = ssub.s32 2048, 2048
      %32 = vsyncadd [#allocation6], %s31
      %s33 = sshll.u32 [#allocation5], 4
      %s34 = int_to_ptr.vmem [resolvable:$true] %s33
      %39 = dma.hbm_to_vmem [thread:$0]  %s1, 2048, %s34, [#allocation6], 128, 128, 8
    $region9: #{tpu_custom_call.1} parent=1 // pred_fallthru
      _
    // Predicated region
    $region10: #{tpu_custom_call.1} parent=1 // pred_check
      _
    $region11: #{tpu_custom_call.1} parent=1 // pred_check_branch
      %41 = sbr.rel (0) target = $region13
    $region12: #{tpu_custom_call.1} parent=1 // pred_region
      _
    $region13: #{tpu_custom_call.1} parent=1 // pred_fallthru
      _
    // Predicated region
    $region14: #{tpu_custom_call.1} parent=1 // pred_check
      _
    $region15: #{tpu_custom_call.1} parent=1 // pred_check_branch
      %43 = sbr.rel (0) target = $region17
    $region16: #{tpu_custom_call.1} parent=1 // pred_region
      %s45 = ssub.s32 2048, 2048
      %46 = vsyncadd [#allocation6], %s45
      %s47 = sshll.u32 [#allocation7], 4
      %s48 = int_to_ptr.vmem [resolvable:$true] %s47
      %53 = dma.hbm_to_vmem [thread:$0]  %s3, 2048, %s48, [#allocation6], 64, 64, 4
    $region17: #{tpu_custom_call.1} parent=1 // pred_fallthru
      _
    // Predicated region
    $region18: #{tpu_custom_call.1} parent=1 // pred_check
      _
    $region19: #{tpu_custom_call.1} parent=1 // pred_check_branch
      %55 = sbr.rel (0) target = $region21
    $region20: #{tpu_custom_call.1} parent=1 // pred_region
      _
    $region21: #{tpu_custom_call.1} parent=1 // pred_fallthru
      _
    // Predicated region
    $region22: #{tpu_custom_call.1} parent=1 // pred_check
      _
    $region23: #{tpu_custom_call.1} parent=1 // pred_check_branch
      %57 = sbr.rel (0) target = $region25
    $region24: #{tpu_custom_call.1} parent=1 // pred_region
      %s59 = ssub.s32 1024, 1024
      %60 = vsyncadd [#allocation9], %s59
      %s61 = sshll.u32 [#allocation8], 4
      %s62 = int_to_ptr.vmem [resolvable:$true] %s61
      %67 = dma.hbm_to_vmem [thread:$0]  %s5, 1024, %s62, [#allocation9], 64, 64, 4
    $region25: #{tpu_custom_call.1} parent=1 // pred_fallthru
      _
    // Predicated region
    $region26: #{tpu_custom_call.1} parent=1 // pred_check
      _
    $region27: #{tpu_custom_call.1} parent=1 // pred_check_branch
      %69 = sbr.rel (0) target = $region29
    $region28: #{tpu_custom_call.1} parent=1 // pred_region
      _
    $region29: #{tpu_custom_call.1} parent=1 // pred_fallthru
      _
    // Predicated region
    $region30: #{tpu_custom_call.1} parent=1 // pred_check
      _
    $region31: #{tpu_custom_call.1} parent=1 // pred_check_branch
      %71 = sbr.rel (0) target = $region33
    $region32: #{tpu_custom_call.1} parent=1 // pred_region
      %72 = dma.done [#allocation3], 128
    $region33: #{tpu_custom_call.1} parent=1 // pred_fallthru
      _
    // Predicated region
    $region34: #{tpu_custom_call.1} parent=1 // pred_check
      _
    $region35: #{tpu_custom_call.1} parent=1 // pred_check_branch
      %74 = sbr.rel (0) target = $region37
    $region36: #{tpu_custom_call.1} parent=1 // pred_region
      %75 = dma.done [#allocation6], 2048
    $region37: #{tpu_custom_call.1} parent=1 // pred_fallthru
      _
    // Predicated region
    $region38: #{tpu_custom_call.1} parent=1 // pred_check
      _
    $region39: #{tpu_custom_call.1} parent=1 // pred_check_branch
      %77 = sbr.rel (0) target = $region41
    $region40: #{tpu_custom_call.1} parent=1 // pred_region
      %78 = dma.done [#allocation6], 2048
    $region41: #{tpu_custom_call.1} parent=1 // pred_fallthru
      _
    // Predicated region
    $region42: #{tpu_custom_call.1} parent=1 // pred_check
      _
    $region43: #{tpu_custom_call.1} parent=1 // pred_check_branch
      %80 = sbr.rel (0) target = $region45
    $region44: #{tpu_custom_call.1} parent=1 // pred_region
      %81 = dma.done [#allocation9], 1024
    $region45: #{tpu_custom_call.1} parent=1 // pred_fallthru
      _
    %v83 = vld [vmem:[#allocation2] sm:$0xf]
    %v84 = vld [vmem:[#allocation2 + $0x4] sm:$0xf]
    %v85 = vld [vmem:[#allocation5] sm:$0xff]
    %v86 = vld [vmem:[#allocation5 + $0x8] sm:$0xff]
    %v87 = vld [vmem:[#allocation5 + $0x10] sm:$0xff]
    %v88 = vld [vmem:[#allocation5 + $0x18] sm:$0xff]
    %v89 = vld [vmem:[#allocation5 + $0x20] sm:$0xff]
    %v90 = vld [vmem:[#allocation5 + $0x28] sm:$0xff]
    %v91 = vld [vmem:[#allocation5 + $0x30] sm:$0xff]
    %v92 = vld [vmem:[#allocation5 + $0x38] sm:$0xff]
    %v93 = vld [vmem:[#allocation5 + $0x40] sm:$0xff]
    %v94 = vld [vmem:[#allocation5 + $0x48] sm:$0xff]
    %v95 = vld [vmem:[#allocation5 + $0x50] sm:$0xff]
    %v96 = vld [vmem:[#allocation5 + $0x58] sm:$0xff]
    %v97 = vld [vmem:[#allocation5 + $0x60] sm:$0xff]
    %v98 = vld [vmem:[#allocation5 + $0x68] sm:$0xff]
    %v99 = vld [vmem:[#allocation5 + $0x70] sm:$0xff]
    %v100 = vld [vmem:[#allocation5 + $0x78] sm:$0xff]
    %v101 = vld [vmem:[%s2] sm:$0x3]
    %v103 = vlaneseq
    %v104 = vshrl.u32 %v103, 7
    %v105 = vsub.s32 0, %v104
    %v106 = vrot.slane %v101, %v105
    %v107 = vlaneseq
    %v108 = vshrl.u32 %v107, 7
    %v109 = vsub.s32 1, %v108
    %v110 = vrot.slane %v101, %v109
    %v115 = vunpack.c.l.b16 %v83
    %v116 = vunpack.c.l.b16 %v84
    %v117 = vpack.c.b16 %v116, %v115
    %v135 = vunpack.c.l.b16 %v85
    %v136 = vunpack.c.h.b16 %v85
    %v137 = vunpack.c.l.b16 %v86
    %v138 = vunpack.c.h.b16 %v86
    %v139 = vunpack.c.l.b16 %v87
    %v140 = vunpack.c.h.b16 %v87
    %v141 = vunpack.c.l.b16 %v88
    %v142 = vunpack.c.h.b16 %v88
    %v143 = vunpack.c.l.b16 %v89
    %v144 = vunpack.c.h.b16 %v89
    %v145 = vunpack.c.l.b16 %v90
    %v146 = vunpack.c.h.b16 %v90
    %v147 = vunpack.c.l.b16 %v91
    %v148 = vunpack.c.h.b16 %v91
    %v149 = vunpack.c.l.b16 %v92
    %v150 = vunpack.c.h.b16 %v92
    %v151 = vunpack.c.l.b16 %v93
    %v152 = vunpack.c.h.b16 %v93
    %v153 = vunpack.c.l.b16 %v94
    %v154 = vunpack.c.h.b16 %v94
    %v155 = vunpack.c.l.b16 %v95
    %v156 = vunpack.c.h.b16 %v95
    %v157 = vunpack.c.l.b16 %v96
    %v158 = vunpack.c.h.b16 %v96
    %v159 = vunpack.c.l.b16 %v97
    %v160 = vunpack.c.h.b16 %v97
    %v161 = vunpack.c.l.b16 %v98
    %v162 = vunpack.c.h.b16 %v98
    %v163 = vunpack.c.l.b16 %v99
    %v164 = vunpack.c.h.b16 %v99
    %v165 = vunpack.c.l.b16 %v100
    %v166 = vunpack.c.h.b16 %v100
    %v167 = vpack.c.b16 %v137, %v135
    %v168 = vpack.c.b16 %v138, %v136
    %v169 = vpack.c.b16 %v141, %v139
    %v170 = vpack.c.b16 %v142, %v140
    %v171 = vpack.c.b16 %v145, %v143
    %v172 = vpack.c.b16 %v146, %v144
    %v173 = vpack.c.b16 %v149, %v147
    %v174 = vpack.c.b16 %v150, %v148
    %v175 = vpack.c.b16 %v153, %v151
    %v176 = vpack.c.b16 %v154, %v152
    %v177 = vpack.c.b16 %v157, %v155
    %v178 = vpack.c.b16 %v158, %v156
    %v179 = vpack.c.b16 %v161, %v159
    %v180 = vpack.c.b16 %v162, %v160
    %v181 = vpack.c.b16 %v165, %v163
    %v182 = vpack.c.b16 %v166, %v164
    %199 = vmatprep.subr.bf16.mxu0 %v168
    %200 = vmatpush1.bf16.msra.mxu0 %v167
    %201 = vmatprep.subr.bf16.mxu0 %v170
    %202 = vmatpush1.bf16.msra.mxu0 %v169
    %203 = vmatprep.subr.bf16.mxu0 %v172
    %204 = vmatpush1.bf16.msra.mxu0 %v171
    %205 = vmatprep.subr.bf16.mxu0 %v174
    %206 = vmatpush1.bf16.msra.mxu0 %v173
    %207 = vmatprep.subr.bf16.mxu0 %v176
    %208 = vmatpush1.bf16.msra.mxu0 %v175
    %209 = vmatprep.subr.bf16.mxu0 %v178
    %210 = vmatpush1.bf16.msra.mxu0 %v177
    %211 = vmatprep.subr.bf16.mxu0 %v180
    %212 = vmatpush1.bf16.msra.mxu0 %v179
    %213 = vmatprep.subr.bf16.mxu0 %v182
    %214 = vmatpush1.bf16.msra.mxu0 %v181
    %215 = vmatprep.subr.bf16.mxu0 0
    %216 = vmatpush1.bf16.msra.mxu0 0
    %217 = vmatprep.subr.bf16.mxu0 0
    %218 = vmatpush1.bf16.msra.mxu0 0
    %219 = vmatprep.subr.bf16.mxu0 0
    %220 = vmatpush1.bf16.msra.mxu0 0
    %221 = vmatprep.subr.bf16.mxu0 0
    %222 = vmatpush1.bf16.msra.mxu0 0
    %223 = vmatprep.subr.bf16.mxu0 0
    %224 = vmatpush1.bf16.msra.mxu0 0
    %225 = vmatprep.subr.bf16.mxu0 0
    %226 = vmatpush1.bf16.msra.mxu0 0
    %227 = vmatprep.subr.bf16.mxu0 0
    %228 = vmatpush1.bf16.msra.mxu0 0
    %229 = vmatprep.subr.bf16.mxu0 0
    %230 = vmatpush1.bf16.msra.mxu0 0
    %231 = vmatprep.mubr.bf16.mxu0 0
    %232 = vmatmul.mubr.bf16.gmra.mrb[0].mxu0 %v117
    %v233 = vpop.f32.mrb[0].mxu0
    %v234 = vadd.f32 %v106, %v233
    %v235 = vpop.f32.mrb[0].mxu0
    %v236 = vadd.f32 %v110, %v235
    %v237 = vpop.f32.mrb[0].mxu0
    %v238 = vadd.f32 %v106, %v237
    %v239 = vpop.f32.mrb[0].mxu0
    %v240 = vadd.f32 %v110, %v239
    %241 = vdwg.mxu0
    %v242 = vmax.f32 %v234, 0.0
    %v243 = vmax.f32 %v236, 0.0
    %v244 = vmax.f32 %v238, 0.0
    %v245 = vmax.f32 %v240, 0.0
    %v246 = vpack.c.bf16 %v244, %v242
    %v247 = vpack.c.bf16 %v245, %v243
    %v248 = vld [vmem:[#allocation7] sm:$0xf]
    %v249 = vld [vmem:[#allocation7 + $0x4] sm:$0xf]
    %v250 = vld [vmem:[#allocation7 + $0x8] sm:$0xf]
    %v251 = vld [vmem:[#allocation7 + $0xc] sm:$0xf]
    %v252 = vld [vmem:[#allocation7 + $0x10] sm:$0xf]
    %v253 = vld [vmem:[#allocation7 + $0x14] sm:$0xf]
    %v254 = vld [vmem:[#allocation7 + $0x18] sm:$0xf]
    %v255 = vld [vmem:[#allocation7 + $0x1c] sm:$0xf]
    %v256 = vld [vmem:[#allocation7 + $0x20] sm:$0xf]
    %v257 = vld [vmem:[#allocation7 + $0x24] sm:$0xf]
    %v258 = vld [vmem:[#allocation7 + $0x28] sm:$0xf]
    %v259 = vld [vmem:[#allocation7 + $0x2c] sm:$0xf]
    %v260 = vld [vmem:[#allocation7 + $0x30] sm:$0xf]
    %v261 = vld [vmem:[#allocation7 + $0x34] sm:$0xf]
    %v262 = vld [vmem:[#allocation7 + $0x38] sm:$0xf]
    %v263 = vld [vmem:[#allocation7 + $0x3c] sm:$0xf]
    %v264 = vld [vmem:[#allocation7 + $0x40] sm:$0xf]
    %v265 = vld [vmem:[#allocation7 + $0x44] sm:$0xf]
    %v266 = vld [vmem:[#allocation7 + $0x48] sm:$0xf]
    %v267 = vld [vmem:[#allocation7 + $0x4c] sm:$0xf]
    %v268 = vld [vmem:[#allocation7 + $0x50] sm:$0xf]
    %v269 = vld [vmem:[#allocation7 + $0x54] sm:$0xf]
    %v270 = vld [vmem:[#allocation7 + $0x58] sm:$0xf]
    %v271 = vld [vmem:[#allocation7 + $0x5c] sm:$0xf]
    %v272 = vld [vmem:[#allocation7 + $0x60] sm:$0xf]
    %v273 = vld [vmem:[#allocation7 + $0x64] sm:$0xf]
    %v274 = vld [vmem:[#allocation7 + $0x68] sm:$0xf]
    %v275 = vld [vmem:[#allocation7 + $0x6c] sm:$0xf]
    %v276 = vld [vmem:[#allocation7 + $0x70] sm:$0xf]
    %v277 = vld [vmem:[#allocation7 + $0x74] sm:$0xf]
    %v278 = vld [vmem:[#allocation7 + $0x78] sm:$0xf]
    %v279 = vld [vmem:[#allocation7 + $0x7c] sm:$0xf]
    %v280 = vld [vmem:[%s4] sm:$0x1]
    %v282 = vlaneseq
    %v283 = vshrl.u32 %v282, 7
    %v284 = vsub.s32 0, %v283
    %v285 = vrot.slane %v280, %v284
    %v319 = vunpack.c.l.b16 %v248
    %v320 = vunpack.c.l.b16 %v249
    %v321 = vunpack.c.l.b16 %v250
    %v322 = vunpack.c.l.b16 %v251
    %v323 = vunpack.c.l.b16 %v252
    %v324 = vunpack.c.l.b16 %v253
    %v325 = vunpack.c.l.b16 %v254
    %v326 = vunpack.c.l.b16 %v255
    %v327 = vunpack.c.l.b16 %v256
    %v328 = vunpack.c.l.b16 %v257
    %v329 = vunpack.c.l.b16 %v258
    %v330 = vunpack.c.l.b16 %v259
    %v331 = vunpack.c.l.b16 %v260
    %v332 = vunpack.c.l.b16 %v261
    %v333 = vunpack.c.l.b16 %v262
    %v334 = vunpack.c.l.b16 %v263
    %v335 = vunpack.c.l.b16 %v264
    %v336 = vunpack.c.l.b16 %v265
    %v337 = vunpack.c.l.b16 %v266
    %v338 = vunpack.c.l.b16 %v267
    %v339 = vunpack.c.l.b16 %v268
    %v340 = vunpack.c.l.b16 %v269
    %v341 = vunpack.c.l.b16 %v270
    %v342 = vunpack.c.l.b16 %v271
    %v343 = vunpack.c.l.b16 %v272
    %v344 = vunpack.c.l.b16 %v273
    %v345 = vunpack.c.l.b16 %v274
    %v346 = vunpack.c.l.b16 %v275
    %v347 = vunpack.c.l.b16 %v276
    %v348 = vunpack.c.l.b16 %v277
    %v349 = vunpack.c.l.b16 %v278
    %v350 = vunpack.c.l.b16 %v279
    %v351 = vpack.c.b16 %v320, %v319
    %v352 = vpack.c.b16 %v322, %v321
    %v353 = vpack.c.b16 %v324, %v323
    %v354 = vpack.c.b16 %v326, %v325
    %v355 = vpack.c.b16 %v328, %v327
    %v356 = vpack.c.b16 %v330, %v329
    %v357 = vpack.c.b16 %v332, %v331
    %v358 = vpack.c.b16 %v334, %v333
    %v359 = vpack.c.b16 %v336, %v335
    %v360 = vpack.c.b16 %v338, %v337
    %v361 = vpack.c.b16 %v340, %v339
    %v362 = vpack.c.b16 %v342, %v341
    %v363 = vpack.c.b16 %v344, %v343
    %v364 = vpack.c.b16 %v346, %v345
    %v365 = vpack.c.b16 %v348, %v347
    %v366 = vpack.c.b16 %v350, %v349
    %383 = vmatprep.subr.bf16.mxu0 0
    %384 = vmatpush1.bf16.msra.mxu0 %v351
    %385 = vmatprep.subr.bf16.mxu0 0
    %386 = vmatpush1.bf16.msra.mxu0 %v352
    %387 = vmatprep.subr.bf16.mxu0 0
    %388 = vmatpush1.bf16.msra.mxu0 %v353
    %389 = vmatprep.subr.bf16.mxu0 0
    %390 = vmatpush1.bf16.msra.mxu0 %v354
    %391 = vmatprep.subr.bf16.mxu0 0
    %392 = vmatpush1.bf16.msra.mxu0 %v355
    %393 = vmatprep.subr.bf16.mxu0 0
    %394 = vmatpush1.bf16.msra.mxu0 %v356
    %395 = vmatprep.subr.bf16.mxu0 0
    %396 = vmatpush1.bf16.msra.mxu0 %v357
    %397 = vmatprep.subr.bf16.mxu0 0
    %398 = vmatpush1.bf16.msra.mxu0 %v358
    %399 = vmatprep.subr.bf16.mxu0 0
    %400 = vmatpush1.bf16.msra.mxu0 %v359
    %401 = vmatprep.subr.bf16.mxu0 0
    %402 = vmatpush1.bf16.msra.mxu0 %v360
    %403 = vmatprep.subr.bf16.mxu0 0
    %404 = vmatpush1.bf16.msra.mxu0 %v361
    %405 = vmatprep.subr.bf16.mxu0 0
    %406 = vmatpush1.bf16.msra.mxu0 %v362
    %407 = vmatprep.subr.bf16.mxu0 0
    %408 = vmatpush1.bf16.msra.mxu0 %v363
    %409 = vmatprep.subr.bf16.mxu0 0
    %410 = vmatpush1.bf16.msra.mxu0 %v364
    %411 = vmatprep.subr.bf16.mxu0 0
    %412 = vmatpush1.bf16.msra.mxu0 %v365
    %413 = vmatprep.subr.bf16.mxu0 0
    %414 = vmatpush1.bf16.msra.mxu0 %v366
    %415 = vmatprep.mubr.bf16.mxu0 %v247
    %416 = vmatmul.mubr.bf16.gmra.mrb[0].mxu0 %v246
    %v417 = vpop.f32.mrb[0].mxu0
    %v418 = vadd.f32 %v285, %v417
    %v419 = vpop.f32.mrb[0].mxu0
    %v420 = vpop.f32.mrb[0].mxu0
    %v421 = vadd.f32 %v285, %v420
    %v422 = vpop.f32.mrb[0].mxu0
    %423 = vdwg.mxu0
    %v424 = vmax.f32 %v418, 0.0
    %v425 = vmax.f32 %v421, 0.0
    %v426 = vpack.c.bf16 %v425, %v424
    %v427 = vld [vmem:[#allocation8] sm:$0xf]
    %v428 = vld [vmem:[#allocation8 + $0x4] sm:$0xf]
    %v429 = vld [vmem:[#allocation8 + $0x8] sm:$0xf]
    %v430 = vld [vmem:[#allocation8 + $0xc] sm:$0xf]
    %v431 = vld [vmem:[#allocation8 + $0x10] sm:$0xf]
    %v432 = vld [vmem:[#allocation8 + $0x14] sm:$0xf]
    %v433 = vld [vmem:[#allocation8 + $0x18] sm:$0xf]
    %v434 = vld [vmem:[#allocation8 + $0x1c] sm:$0xf]
    %v435 = vld [vmem:[#allocation8 + $0x20] sm:$0xf]
    %v436 = vld [vmem:[#allocation8 + $0x24] sm:$0xf]
    %v437 = vld [vmem:[#allocation8 + $0x28] sm:$0xf]
    %v438 = vld [vmem:[#allocation8 + $0x2c] sm:$0xf]
    %v439 = vld [vmem:[#allocation8 + $0x30] sm:$0xf]
    %v440 = vld [vmem:[#allocation8 + $0x34] sm:$0xf]
    %v441 = vld [vmem:[#allocation8 + $0x38] sm:$0xf]
    %v442 = vld [vmem:[#allocation8 + $0x3c] sm:$0xf]
    %v443 = vld [vmem:[%s6] sm:$0x1]
    %v445 = vlaneseq
    %v446 = vshrl.u32 %v445, 7
    %v447 = vsub.s32 0, %v446
    %v448 = vrot.slane %v443, %v447
    %v466 = vunpack.c.l.b16 %v427
    %v467 = vunpack.c.l.b16 %v428
    %v468 = vunpack.c.l.b16 %v429
    %v469 = vunpack.c.l.b16 %v430
    %v470 = vunpack.c.l.b16 %v431
    %v471 = vunpack.c.l.b16 %v432
    %v472 = vunpack.c.l.b16 %v433
    %v473 = vunpack.c.l.b16 %v434
    %v474 = vunpack.c.l.b16 %v435
    %v475 = vunpack.c.l.b16 %v436
    %v476 = vunpack.c.l.b16 %v437
    %v477 = vunpack.c.l.b16 %v438
    %v478 = vunpack.c.l.b16 %v439
    %v479 = vunpack.c.l.b16 %v440
    %v480 = vunpack.c.l.b16 %v441
    %v481 = vunpack.c.l.b16 %v442
    %v482 = vpack.c.b16 %v467, %v466
    %v483 = vpack.c.b16 %v469, %v468
    %v484 = vpack.c.b16 %v471, %v470
    %v485 = vpack.c.b16 %v473, %v472
    %v486 = vpack.c.b16 %v475, %v474
    %v487 = vpack.c.b16 %v477, %v476
    %v488 = vpack.c.b16 %v479, %v478
    %v489 = vpack.c.b16 %v481, %v480
    %498 = vmatprep.subr.bf16.mxu0 0
    %499 = vmatpush1.bf16.msra.mxu0 %v482
    %500 = vmatprep.subr.bf16.mxu0 0
    %501 = vmatpush1.bf16.msra.mxu0 %v483
    %502 = vmatprep.subr.bf16.mxu0 0
    %503 = vmatpush1.bf16.msra.mxu0 %v484
    %504 = vmatprep.subr.bf16.mxu0 0
    %505 = vmatpush1.bf16.msra.mxu0 %v485
    %506 = vmatprep.subr.bf16.mxu0 0
    %507 = vmatpush1.bf16.msra.mxu0 %v486
    %508 = vmatprep.subr.bf16.mxu0 0
    %509 = vmatpush1.bf16.msra.mxu0 %v487
    %510 = vmatprep.subr.bf16.mxu0 0
    %511 = vmatpush1.bf16.msra.mxu0 %v488
    %512 = vmatprep.subr.bf16.mxu0 0
    %513 = vmatpush1.bf16.msra.mxu0 %v489
    %514 = vmatprep.subr.bf16.mxu0 0
    %515 = vmatpush1.bf16.msra.mxu0 0
    %516 = vmatprep.subr.bf16.mxu0 0
    %517 = vmatpush1.bf16.msra.mxu0 0
    %518 = vmatprep.subr.bf16.mxu0 0
    %519 = vmatpush1.bf16.msra.mxu0 0
    %520 = vmatprep.subr.bf16.mxu0 0
    %521 = vmatpush1.bf16.msra.mxu0 0
    %522 = vmatprep.subr.bf16.mxu0 0
    %523 = vmatpush1.bf16.msra.mxu0 0
    %524 = vmatprep.subr.bf16.mxu0 0
    %525 = vmatpush1.bf16.msra.mxu0 0
    %526 = vmatprep.subr.bf16.mxu0 0
    %527 = vmatpush1.bf16.msra.mxu0 0
    %528 = vmatprep.subr.bf16.mxu0 0
    %529 = vmatpush1.bf16.msra.mxu0 0
    %530 = vmatprep.mubr.bf16.mxu0 0
    %531 = vmatmul.mubr.bf16.gmra.mrb[0].mxu0 %v426
    %v532 = vpop.f32.mrb[0].mxu0
    %v533 = vadd.f32 %v448, %v532
    %v534 = vpop.f32.mrb[0].mxu0
    %v535 = vpop.f32.mrb[0].mxu0
    %v536 = vadd.f32 %v448, %v535
    %v537 = vpop.f32.mrb[0].mxu0
    %538 = vdwg.mxu0
    %539 = vst [vmem:[#allocation10] sm:$0xff] %v533
    %540 = vst [vmem:[#allocation10 + $0x8] sm:$0xff] %v536
    // Predicated region
    $region46: #{tpu_custom_call.1} parent=1 // pred_check
      _
    $region47: #{tpu_custom_call.1} parent=1 // pred_check_branch
      %542 = sbr.rel (0) target = $region49
    $region48: #{tpu_custom_call.1} parent=1 // pred_region
      %s544 = ssub.s32 256, 256
      %545 = vsyncadd [#allocation4], %s544
      %s546 = sshll.u32 [#allocation10], 4
      %s547 = int_to_ptr.vmem [resolvable:$true] %s546
      %552 = dma.vmem_to_hbm [thread:$0]  %s547, 256, %s7, [#allocation4], 128, 128, 8
    $region49: #{tpu_custom_call.1} parent=1 // pred_fallthru
      _
    // Predicated region
    $region50: #{tpu_custom_call.1} parent=1 // pred_check
      _
    $region51: #{tpu_custom_call.1} parent=1 // pred_check_branch
      %554 = sbr.rel (0) target = $region53
    $region52: #{tpu_custom_call.1} parent=1 // pred_region
      %555 = dma.done [#allocation4], 256
    $region53: #{tpu_custom_call.1} parent=1 // pred_fallthru
      _
    %556 = vsyncpa [#allocation3], 1
    %557 = vsyncpa [#allocation6], 1
    %558 = vsyncpa [#allocation9], 1
    %559 = vsyncpa [#allocation4], 1

</llo_original>
